<compile_context>
chip_gen: v6e
topology: v6e:2x2x1
jax: 0.10.0
libtpu: 0.0.40
codegen_flags: <defaults>
</compile_context>

<pallas_src>
import jax
import jax.numpy as jnp
from jax.experimental import pallas as pl
from jax.experimental.pallas import tpu as pltpu


_SUBLANE = 8     # f32 sublane height
_LANE = 128      # lane width
_TB_CAP = 8192   # max batch rows per grid step


def _cdiv(a, b):
    return -(-a // b)


def _round_up(n, m):
    return _cdiv(n, m) * m


def _fused_classifier_kernel(x_ref, wt_ref, bt_ref, ot_ref):
    # probs^T (n_out, tb) = sigmoid(w_fused^T @ x^T + b^T), computed via the q.k^T-style
    # contraction on the last dims of both operands (MXU transposed-operand matmul).
    logits_t = jax.lax.dot_general(
        wt_ref[...], x_ref[...],
        dimension_numbers=(((1,), (1,)), ((), ())),
        preferred_element_type=jnp.float32)
    # Sigmoid on (n_out, tb): batch on lanes -> only ~tb/128 vregs hit the EUP (vs tb/8 before).
    ot_ref[...] = jax.nn.sigmoid(logits_t + bt_ref[...])


def linear_classifier_forward(x, w1, b1, w2, b2):
    """x: (B, L, 5). Weights stored (in_features, out_features). Returns probs: (B, 2) float32."""
    B = x.shape[0]
    x_flat = x.reshape(B, -1).astype(jnp.float32)            # nn.Flatten()
    d_in = x_flat.shape[1]
    n_out = w2.shape[1]

    # Exact algebraic fusion of the two linear layers (no nonlinearity between them):
    #   (x @ w1 + b1) @ w2 + b2 == x @ (w1 @ w2) + (b1 @ w2 + b2)
    w_fused = w1.astype(jnp.float32) @ w2.astype(jnp.float32)            # (d_in, n_out)
    b_fused = b1.astype(jnp.float32) @ w2.astype(jnp.float32) + b2.astype(jnp.float32)
    w_fused_t = w_fused.T                                                # (n_out, d_in)
    b_fused_t = b_fused.reshape(n_out, 1)                                # (n_out, 1)

    # Batch tiling: one full block when it fits (no padding at all, full-dim blocks are always
    # legal); otherwise balanced, lane-aligned (multiple-of-128) tiles so the transposed output
    # block stays legal/lane-dense and the v7x "parallel" axis gets >= 2 tiles. Pallas handles
    # the final partial block (padded reads, OOB writes dropped; compute is row-local so safe).
    if B <= _TB_CAP:
        tb = B
    else:
        tb = _round_up(_cdiv(B, _cdiv(B, _TB_CAP)), _LANE)
    grid = (_cdiv(B, tb),)

    # NOTE: for production tiny batches (a few rows) a plain XLA dot would beat the pallas_call
    # dispatch cost; we always go through the kernel here so the Pallas path is exercised.
    out_t = pl.pallas_call(
        _fused_classifier_kernel,
        out_shape=jax.ShapeDtypeStruct((n_out, B), jnp.float32),
        grid=grid,
        in_specs=[
            pl.BlockSpec((tb, d_in), lambda i: (i, 0)),      # x: streamed over batch, K un-padded
            pl.BlockSpec((n_out, d_in), lambda i: (0, 0)),   # fused weight^T: resident
            pl.BlockSpec((n_out, 1), lambda i: (0, 0)),      # fused bias^T: resident
        ],
        out_specs=pl.BlockSpec((n_out, tb), lambda i: (0, i)),  # lane-dense transposed output
        compiler_params=pltpu.CompilerParams(
            # Shards batch tiles across both TensorCores on v7x; serial-loop no-op on v5e/v6e.
            dimension_semantics=("parallel",),
        ),
    )(x_flat, w_fused_t, b_fused_t)

    # Tiny XLA epilogue: (n_out, B) -> (B, n_out) to match the module's output layout.
    return out_t.T


def init_params(key, max_token_length, hidden=100, n_out=2):
    """Deterministic init mimicking nn.Linear's default U(-1/sqrt(fan_in), 1/sqrt(fan_in))."""
    d_in = max_token_length * 5
    k1, k2, k3, k4 = jax.random.split(key, 4)
    bound1 = 1.0 / jnp.sqrt(d_in)
    bound2 = 1.0 / jnp.sqrt(hidden)
    w1 = jax.random.uniform(k1, (d_in, hidden), jnp.float32, -bound1, bound1)
    b1 = jax.random.uniform(k2, (hidden,), jnp.float32, -bound1, bound1)
    w2 = jax.random.uniform(k3, (hidden, n_out), jnp.float32, -bound2, bound2)
    b2 = jax.random.uniform(k4, (n_out,), jnp.float32, -bound2, bound2)
    return w1, b1, w2, b2


if __name__ == "__main__":
    key = jax.random.PRNGKey(0)
    kx, kp = jax.random.split(key)

    max_token_length = 8   # input features = 8 * 5 = 40
    batch = 2

    x = jax.random.normal(kx, (batch, max_token_length, 5), dtype=jnp.float32)
    w1, b1, w2, b2 = init_params(kp, max_token_length)

    probs = linear_classifier_forward(x, w1, b1, w2, b2)
    probs = jax.block_until_ready(probs)

    # Reference check in plain (float32) JAX, unfused form.
    x_flat = x.reshape(batch, -1)
    ref = jax.nn.sigmoid((x_flat @ w1 + b1) @ w2 + b2)
    assert probs.shape == (batch, 2)
    assert jnp.allclose(probs, ref, atol=1e-5, rtol=1e-5), "mismatch vs reference"

    print("KERNEL_OK")
</pallas_src>

<mosaic_0001>
module attributes {stable_mosaic.version = 11 : i64} {
  func.func @_fused_classifier_kernel(%arg0: i32, %arg1: memref<2x40xf32, #tpu.memory_space<vmem>>, %arg2: memref<2x40xf32, #tpu.memory_space<vmem>>, %arg3: memref<2x1xf32, #tpu.memory_space<vmem>>, %arg4: memref<2x2xf32, #tpu.memory_space<vmem>>) attributes {dimension_semantics = [#tpu.dimension_semantics<parallel>], iteration_bounds = array<i64: 1>, scalar_prefetch = 0 : i64, scratch_operands = 0 : i64, tpu.core_type = #tpu.core_type<tc>, window_params = [{transform_indices = @transform_0, window_bounds = array<i64: 2, 40>}, {pipeline_mode = #tpu.pipeline_mode<synchronous>, transform_indices = @transform_1, window_bounds = array<i64: 2, 40>}, {pipeline_mode = #tpu.pipeline_mode<synchronous>, transform_indices = @transform_2, window_bounds = array<i64: 2, 1>}, {transform_indices = @transform_3, window_bounds = array<i64: 2, 2>}]} {
    %c0 = arith.constant 0 : index
    %c0_0 = arith.constant 0 : index
    %0 = vector.load %arg2[%c0, %c0_0] : memref<2x40xf32, #tpu.memory_space<vmem>>, vector<2x40xf32>
    %c0_1 = arith.constant 0 : index
    %c0_2 = arith.constant 0 : index
    %1 = vector.load %arg1[%c0_1, %c0_2] : memref<2x40xf32, #tpu.memory_space<vmem>>, vector<2x40xf32>
    %cst = arith.constant dense<0.000000e+00> : vector<2x2xf32>
    %2 = tpu.matmul %0, %1, %cst {dimension_numbers = #tpu.dot_dimension_numbers<[1], [1], [0], [0], [0, 0, 1, 0], [], []>} : vector<2x40xf32>, vector<2x40xf32>, vector<2x2xf32> -> vector<2x2xf32>
    %c0_3 = arith.constant 0 : index
    %c0_4 = arith.constant 0 : index
    %3 = vector.load %arg3[%c0_3, %c0_4] : memref<2x1xf32, #tpu.memory_space<vmem>>, vector<2x1xf32>
    %4 = vector.broadcast %3 : vector<2x1xf32> to vector<2x2xf32>
    %5 = arith.addf %2, %4 : vector<2x2xf32>
    %6 = arith.negf %5 : vector<2x2xf32>
    %7 = math.exp %6 : vector<2x2xf32>
    %cst_5 = arith.constant 1.000000e+00 : f32
    %8 = vector.broadcast %cst_5 : f32 to vector<2x2xf32>
    %9 = arith.addf %8, %7 : vector<2x2xf32>
    %10 = arith.divf %8, %9 : vector<2x2xf32>
    %c0_6 = arith.constant 0 : index
    %c0_7 = arith.constant 0 : index
    %11 = vector.load %arg4[%c0_6, %c0_7] : memref<2x2xf32, #tpu.memory_space<vmem>>, vector<2x2xf32>
    tpu.vector_store %arg4[%c0_6, %c0_7], %10 {strides = array<i32>} : memref<2x2xf32, #tpu.memory_space<vmem>>, vector<2x2xf32>,
    return
  }
  func.func @transform_0(%arg0: i32) -> (i32, i32) {
    %c0_i32 = arith.constant 0 : i32
    %c0_i32_0 = arith.constant 0 : i32
    return %arg0, %c0_i32 : i32, i32
  }
  func.func @transform_1(%arg0: i32) -> (i32, i32) {
    %c0_i32 = arith.constant 0 : i32
    %c0_i32_0 = arith.constant 0 : i32
    %c0_i32_1 = arith.constant 0 : i32
    return %c0_i32, %c0_i32_0 : i32, i32
  }
  func.func @transform_2(%arg0: i32) -> (i32, i32) {
    %c0_i32 = arith.constant 0 : i32
    %c0_i32_0 = arith.constant 0 : i32
    %c0_i32_1 = arith.constant 0 : i32
    return %c0_i32, %c0_i32_0 : i32, i32
  }
  func.func @transform_3(%arg0: i32) -> (i32, i32) {
    %c0_i32 = arith.constant 0 : i32
    %c0_i32_0 = arith.constant 0 : i32
    return %c0_i32, %arg0 : i32, i32
  }
}

</mosaic_0001>

<llo_original>
// kernel: tpu_custom_call.1
$region0: #{tpu_custom_call.1}
  #allocation0 [shape = 'u32[]', space=smem, size = 0x4, offset = 0x4, fixed_abs, tag = 'smem constant byte address 0x4 - core index']
  #allocation1 [shape = 'u32[144,128]{1,0:T(1,128)}', space=vmem, size = 0x12000, scoped, tag = 'internal scratch']
  %s0 = inlined_call_operand.vmem [shape: f32[2,40], index: 0, kind: input, shape index: {}]
  %s1 = inlined_call_operand.vmem [shape: f32[2,40], index: 1, kind: input, shape index: {}]
  %s2 = inlined_call_operand.vmem [shape: f32[2,1], index: 2, kind: input, shape index: {}]
  %s3 = inlined_call_operand.hbm [shape: f32[2,2], index: 3, kind: output, shape index: {}]
  %s4 = sld [smem:[#allocation0]]
  $region22: #{tpu_custom_call.1} parent=0
    _
  %s6 = ssub.s32 1, %s4
  %s7 = scalar_select 0, %s6, %s4
  $region1: #{tpu_custom_call.1} parent=0
    #allocation2 [shape = 'u8[1024]{0}', space=vmem, size = 0x400, scoped, tag = 'output window, operand 0, single buffered']
    #allocation3 [shape = 's32[1]{0}', space=sflag, size = 0x4, scoped, tag = 'scoped memory for tpu_custom_call.1']
    %8 = vsyncpa [#allocation3], 0
    // Predicated region
    $region2: #{tpu_custom_call.1} parent=1 // pred_check
      _
    $region3: #{tpu_custom_call.1} parent=1 // pred_check_branch
      %10 = sbr.rel (0) target = $region5
    $region4: #{tpu_custom_call.1} parent=1 // pred_region
      _
    $region5: #{tpu_custom_call.1} parent=1 // pred_fallthru
      _
    // Predicated region
    $region6: #{tpu_custom_call.1} parent=1 // pred_check
      _
    $region7: #{tpu_custom_call.1} parent=1 // pred_check_branch
      %12 = sbr.rel (0) target = $region9
    $region8: #{tpu_custom_call.1} parent=1 // pred_region
      _
    $region9: #{tpu_custom_call.1} parent=1 // pred_fallthru
      _
    // Predicated region
    $region10: #{tpu_custom_call.1} parent=1 // pred_check
      _
    $region11: #{tpu_custom_call.1} parent=1 // pred_check_branch
      %14 = sbr.rel (0) target = $region13
    $region12: #{tpu_custom_call.1} parent=1 // pred_region
      _
    $region13: #{tpu_custom_call.1} parent=1 // pred_fallthru
      _
    %v15 = vld [vmem:[%s1] sm:$0x3]
    %v16 = vld [vmem:[%s0] sm:$0x3]
    %v17 = vld [vmem:[%s2] sm:$0x3]
    %19 = vset.pattern.permute.xlu0 0
    %20 = vperm.xlu0 %19, %v17
    %v21 = vpop.permute.xlu0 %20
    %vm23 = vcmask 326656
    %v25 = vsel %vm23, %v15, 0
    %v28 = vsel %vm23, %v16, 0
    %30 = vmatprep.subr.mxu0 0.0
    %31 = vmatpush1.xpose.msra.mxu0 0.0
    %32 = vmatprep.subr.mxu0 0.0
    %33 = vmatpush1.xpose.msra.mxu0 0.0
    %34 = vmatprep.subr.mxu0 0.0
    %35 = vmatpush1.xpose.msra.mxu0 0.0
    %36 = vmatprep.subr.mxu0 0.0
    %37 = vmatpush1.xpose.msra.mxu0 0.0
    %38 = vmatprep.subr.mxu0 0.0
    %39 = vmatpush1.xpose.msra.mxu0 0.0
    %40 = vmatprep.subr.mxu0 0.0
    %41 = vmatpush1.xpose.msra.mxu0 0.0
    %42 = vmatprep.subr.mxu0 0.0
    %43 = vmatpush1.xpose.msra.mxu0 0.0
    %44 = vmatprep.subr.mxu0 0.0
    %45 = vmatpush1.xpose.msra.mxu0 0.0
    %46 = vmatprep.subr.mxu0 0.0
    %47 = vmatpush1.xpose.msra.mxu0 0.0
    %48 = vmatprep.subr.mxu0 0.0
    %49 = vmatpush1.xpose.msra.mxu0 0.0
    %50 = vmatprep.subr.mxu0 0.0
    %51 = vmatpush1.xpose.msra.mxu0 0.0
    %52 = vmatprep.subr.mxu0 0.0
    %53 = vmatpush1.xpose.msra.mxu0 0.0
    %54 = vmatprep.subr.mxu0 0.0
    %55 = vmatpush1.xpose.msra.mxu0 0.0
    %56 = vmatprep.subr.mxu0 0.0
    %57 = vmatpush1.xpose.msra.mxu0 0.0
    %58 = vmatprep.subr.mxu0 0.0
    %59 = vmatpush1.xpose.msra.mxu0 0.0
    %60 = vmatprep.subr.mxu0 0.0
    %61 = vmatpush1.xpose.msra.mxu0 %v28
    %62 = vmatprep.subr.mxu0 0.0
    %63 = vmatpush2.xpose.msra.mxu0 0.0
    %64 = vmatprep.subr.mxu0 0.0
    %65 = vmatpush2.xpose.msra.mxu0 0.0
    %66 = vmatprep.subr.mxu0 0.0
    %67 = vmatpush2.xpose.msra.mxu0 0.0
    %68 = vmatprep.subr.mxu0 0.0
    %69 = vmatpush2.xpose.msra.mxu0 0.0
    %70 = vmatprep.subr.mxu0 0.0
    %71 = vmatpush2.xpose.msra.mxu0 0.0
    %72 = vmatprep.subr.mxu0 0.0
    %73 = vmatpush2.xpose.msra.mxu0 0.0
    %74 = vmatprep.subr.mxu0 0.0
    %75 = vmatpush2.xpose.msra.mxu0 0.0
    %76 = vmatprep.subr.mxu0 0.0
    %77 = vmatpush2.xpose.msra.mxu0 0.0
    %78 = vmatprep.subr.mxu0 0.0
    %79 = vmatpush2.xpose.msra.mxu0 0.0
    %80 = vmatprep.subr.mxu0 0.0
    %81 = vmatpush2.xpose.msra.mxu0 0.0
    %82 = vmatprep.subr.mxu0 0.0
    %83 = vmatpush2.xpose.msra.mxu0 0.0
    %84 = vmatprep.subr.mxu0 0.0
    %85 = vmatpush2.xpose.msra.mxu0 0.0
    %86 = vmatprep.subr.mxu0 0.0
    %87 = vmatpush2.xpose.msra.mxu0 0.0
    %88 = vmatprep.subr.mxu0 0.0
    %89 = vmatpush2.xpose.msra.mxu0 0.0
    %90 = vmatprep.subr.mxu0 0.0
    %91 = vmatpush2.xpose.msra.mxu0 0.0
    %92 = vmatprep.subr.mxu0 0.0
    %93 = vmatpush2.xpose.msra.mxu0 0.0
    %94 = vmatprep.mubr.f32.mxu0 0.0
    %95 = vmatmul.mubr.f32.gmra.mxu0 %v25
    %v96 = vpop.f32.mrf.mxu0
    %v97 = vadd.f32 %v21, %v96
    %v98 = vpop.f32.mrf.mxu0
    %99 = vdwg.mxu0
    %v100 = vxor.u32 %v97, 2147483648
    %v101 = vmul.f32 %v100, 1.442695
    %v102 = vpow.pop %v101
    %v103 = vadd.f32 %v102, 1.0
    %v104 = vrcp.pop %v103
    %v105 = vmul.f32 1.0, %v104
    %vm106 = vcmask 9216
    %107 = vst.msk [vmem:[#allocation2] sm:$0x3] %vm106, %v105
    // Predicated region
    $region14: #{tpu_custom_call.1} parent=1 // pred_check
      _
    $region15: #{tpu_custom_call.1} parent=1 // pred_check_branch
      %109 = sbr.rel (0) target = $region17
    $region16: #{tpu_custom_call.1} parent=1 // pred_region
      %s111 = ssub.s32 32, 32
      %112 = vsyncadd [#allocation3], %s111
      %s114 = sshll.u32 [#allocation2], 4
      %s115 = int_to_ptr.vmem [resolvable:$true] %s114
      %117 = dma.vmem_to_hbm [thread:$0]  %s115, 32, %s3, [#allocation3]
    $region17: #{tpu_custom_call.1} parent=1 // pred_fallthru
      _
    // Predicated region
    $region18: #{tpu_custom_call.1} parent=1 // pred_check
      _
    $region19: #{tpu_custom_call.1} parent=1 // pred_check_branch
      %119 = sbr.rel (0) target = $region21
    $region20: #{tpu_custom_call.1} parent=1 // pred_region
      %120 = dma.done [#allocation3], 32
    $region21: #{tpu_custom_call.1} parent=1 // pred_fallthru
      _
    %121 = vsyncpa [#allocation3], 1

</llo_original>
